<compile_context>
chip_gen: v5e
topology: v5e:2x2
jax: 0.10.0
libtpu: 0.0.40
codegen_flags: <defaults>
</compile_context>

<pallas_src>
import numpy as np
import jax
import jax.numpy as jnp
from jax.experimental import pallas as pl
from jax.experimental.pallas import tpu as pltpu

_LANE = 128
_SUBLANE = 8


def _ceil_to(x: int, m: int) -> int:
    return ((x + m - 1) // m) * m


def _pick_tile(dim_p: int, t_max: int, align: int = _LANE) -> int:
    """Largest multiple of `align` that divides `dim_p` and is <= t_max."""
    t = max(align, min(t_max, dim_p))
    t -= t % align
    while dim_p % t:
        t -= align
    return t


def _sigmoid(z):
    """Exact sigmoid inside a kernel: exp on the EUP + pl.reciprocal (no VPU divide)."""
    return pl.reciprocal(1.0 + jnp.exp(-z), approx=False)


# ----------------------- per-layer (tiled, fallback) kernels -----------------------

def _make_matmul_sigmoid_k1_kernel(n_terms: int):
    """sigmoid(sum_i x_i @ w_i + b) for a single K step: no accumulator scratch."""
    def kernel(*refs):
        xs = refs[:n_terms]
        ws = refs[n_terms:2 * n_terms]
        b_ref = refs[2 * n_terms]
        o_ref = refs[2 * n_terms + 1]
        w0 = ws[0][...]
        acc = jnp.dot(xs[0][...].astype(w0.dtype), w0,
                      preferred_element_type=jnp.float32)
        for t in range(1, n_terms):
            wt = ws[t][...]
            acc = acc + jnp.dot(xs[t][...].astype(wt.dtype), wt,
                                preferred_element_type=jnp.float32)
        o_ref[...] = _sigmoid(acc + b_ref[...]).astype(o_ref.dtype)
    return kernel


def _make_matmul_sigmoid_kernel(n_terms: int):
    """Multi-K-step variant with a resident f32 accumulator."""
    def kernel(*refs):
        xs = refs[:n_terms]
        ws = refs[n_terms:2 * n_terms]
        b_ref = refs[2 * n_terms]
        o_ref = refs[2 * n_terms + 1]
        acc_ref = refs[2 * n_terms + 2]
        k = pl.program_id(2)

        @pl.when(k == 0)
        def _init():
            acc_ref[...] = jnp.zeros_like(acc_ref)

        w0 = ws[0][...]
        part = jnp.dot(xs[0][...].astype(w0.dtype), w0,
                       preferred_element_type=jnp.float32)
        for t in range(1, n_terms):
            wt = ws[t][...]
            part = part + jnp.dot(xs[t][...].astype(wt.dtype), wt,
                                  preferred_element_type=jnp.float32)
        acc_ref[...] += part

        @pl.when(k == pl.num_programs(2) - 1)
        def _finalize():
            o_ref[...] = _sigmoid(acc_ref[...] + b_ref[...]).astype(o_ref.dtype)
    return kernel


def matmul_bias_sigmoid(xs, wts, b_p, n_out, *, tm=256, tn=512, tk=512):
    """sigmoid(sum_i xs[i] @ wts[i] + b)[:M, :n_out].

    xs[i]: [M, K_i] activations (unpadded).  wts[i]: [Kp, Np] weights already
    transposed and padded to 128-multiples at init.  b_p: [1, Np] f32 bias.
    All wts must share (Kp, Np).
    """
    n_terms = len(xs)
    M = xs[0].shape[0]
    Kp, Np = wts[0].shape
    for x, w in zip(xs, wts):
        assert x.shape[0] == M and w.shape == (Kp, Np)
    dtype = xs[0].dtype

    tm = min(tm, _ceil_to(M, _SUBLANE))
    Mp = _ceil_to(M, tm)
    tn = _pick_tile(Np, tn)
    tk = _pick_tile(Kp, tk)
    # v7x megacore: make sure there are >=2 parallel (M,N) grid steps if possible.
    if (Mp // tm) * (Np // tn) < 2 and tn > _LANE:
        tn = _pick_tile(Np, tn // 2)

    xs_p = [jnp.pad(x, ((0, Mp - M), (0, Kp - x.shape[1]))) for x in xs]

    grid_k = Kp // tk
    grid = (Mp // tm, Np // tn, grid_k)

    x_specs = [pl.BlockSpec((tm, tk), lambda i, j, k: (i, k)) for _ in range(n_terms)]
    w_specs = [pl.BlockSpec((tk, tn), lambda i, j, k: (k, j)) for _ in range(n_terms)]
    b_spec = pl.BlockSpec((1, tn), lambda i, j, k: (0, j))
    out_spec = pl.BlockSpec((tm, tn), lambda i, j, k: (i, j))

    if grid_k == 1:
        kernel = _make_matmul_sigmoid_k1_kernel(n_terms)
        scratch = []
    else:
        kernel = _make_matmul_sigmoid_kernel(n_terms)
        scratch = [pltpu.VMEM((tm, tn), jnp.float32)]

    out = pl.pallas_call(
        kernel,
        out_shape=jax.ShapeDtypeStruct((Mp, Np), dtype),
        grid_spec=pltpu.PrefetchScalarGridSpec(
            num_scalar_prefetch=0,
            grid=grid,
            in_specs=x_specs + w_specs + [b_spec],
            out_specs=out_spec,
            scratch_shapes=scratch,
        ),
        compiler_params=pltpu.CompilerParams(
            dimension_semantics=("parallel", "parallel", "arbitrary"),
        ),
    )(*xs_p, *wts, b_p)

    return out[:M, :n_out]


# --------------------------- whole-network fused kernel ---------------------------

def _make_fused_net_kernel(n_in_layers: int, n_out_rest: int):
    """One kernel for the whole forward; all padded weights resident in VMEM."""
    def kernel(*refs):
        it = iter(refs)
        xr = next(it)[...].astype(jnp.float32)
        xc = next(it)[...].astype(jnp.float32)
        for _ in range(n_in_layers):
            w = next(it)[...]
            b = next(it)[...]
            xr = _sigmoid(jnp.dot(xr.astype(w.dtype), w,
                                  preferred_element_type=jnp.float32) + b)
            xc = _sigmoid(jnp.dot(xc.astype(w.dtype), w,
                                  preferred_element_type=jnp.float32) + b)
        # First 'out' layer == concat(x_row, x_col, axis=1) @ W^T, computed as
        # two accumulating matmuls against the pre-split weight halves.
        w_top = next(it)[...]
        w_bot = next(it)[...]
        b0 = next(it)[...]
        y = _sigmoid(jnp.dot(xr.astype(w_top.dtype), w_top,
                             preferred_element_type=jnp.float32)
                     + jnp.dot(xc.astype(w_bot.dtype), w_bot,
                               preferred_element_type=jnp.float32)
                     + b0)
        for _ in range(n_out_rest):
            w = next(it)[...]
            b = next(it)[...]
            y = _sigmoid(jnp.dot(y.astype(w.dtype), w,
                                 preferred_element_type=jnp.float32) + b)
        y_ref = next(it)
        xr_ref = next(it)
        xc_ref = next(it)
        y_ref[...] = y.astype(y_ref.dtype)
        xr_ref[...] = xr.astype(xr_ref.dtype)
        xc_ref[...] = xc.astype(xc_ref.dtype)
    return kernel


# --------------------------------- parameters --------------------------------------

def _pad2(a, dtype):
    k, n = a.shape
    return jnp.pad(a, ((0, _ceil_to(k, _LANE) - k), (0, _ceil_to(n, _LANE) - n))).astype(dtype)


def init_auto_ll(key, n_units_in, n_units_out, weight_dtype=jnp.float32):
    """Mirror AutoLL.__init__: U(-1/sqrt(fan_in), 1/sqrt(fan_in)) weights, zero bias.

    Weights are transposed ([out,in] -> [in,out]) and zero-padded to 128-multiples
    ONCE here.  The first 'out' layer is stored pre-split into the x_row / x_col
    halves so the concat never needs to be materialized.
    """
    dims_in = [int(v) for v in n_units_in]
    dims_out = [int(v) for v in n_units_out]
    assert len(dims_out) >= 2, "AutoLL needs at least one 'out' Linear layer"
    assert dims_out[0] == 2 * dims_in[-1], "first out layer must consume concat(x_row, x_col)"

    params = {"in": [], "out_rest": []}

    def make_w(k, fan_in, fan_out):
        bound = 1.0 / np.sqrt(fan_in)
        return jax.random.uniform(k, (fan_out, fan_in), jnp.float32, -bound, bound)

    for i in range(len(dims_in) - 1):
        key, wk = jax.random.split(key)
        w = make_w(wk, dims_in[i], dims_in[i + 1])
        params["in"].append({
            "w_t": _pad2(w.T, weight_dtype),
            "b": jnp.zeros((1, _ceil_to(dims_in[i + 1], _LANE)), jnp.float32),
            "n_in": dims_in[i], "n_out": dims_in[i + 1],
        })

    # First 'out' layer, split into top (x_row) / bottom (x_col) halves.
    key, wk = jax.random.split(key)
    w = make_w(wk, dims_out[0], dims_out[1])          # [E1, 2*DL]
    w_t = w.T                                         # [2*DL, E1]
    dl = dims_in[-1]
    params["out_first"] = {
        "w_top": _pad2(w_t[:dl], weight_dtype),
        "w_bot": _pad2(w_t[dl:], weight_dtype),
        "b": jnp.zeros((1, _ceil_to(dims_out[1], _LANE)), jnp.float32),
        "n_in_half": dl, "n_out": dims_out[1],
    }

    for i in range(1, len(dims_out) - 1):
        key, wk = jax.random.split(key)
        w = make_w(wk, dims_out[i], dims_out[i + 1])
        params["out_rest"].append({
            "w_t": _pad2(w.T, weight_dtype),
            "b": jnp.zeros((1, _ceil_to(dims_out[i + 1], _LANE)), jnp.float32),
            "n_in": dims_out[i], "n_out": dims_out[i + 1],
        })
    return params


def _fused_vmem_footprint(params, batch):
    """Rough VMEM bytes needed by the fully-fused single-kernel path."""
    mp = _ceil_to(max(batch, 1), _SUBLANE)
    total = 0
    widths = [_LANE]
    for layer in params["in"]:
        total += layer["w_t"].size * layer["w_t"].dtype.itemsize + layer["b"].size * 4
        widths += list(layer["w_t"].shape)
    f = params["out_first"]
    total += (f["w_top"].size + f["w_bot"].size) * f["w_top"].dtype.itemsize + f["b"].size * 4
    widths += list(f["w_top"].shape)
    for layer in params["out_rest"]:
        total += layer["w_t"].size * layer["w_t"].dtype.itemsize + layer["b"].size * 4
        widths += list(layer["w_t"].shape)
    total += 8 * mp * max(widths) * 4   # a handful of live f32 activations
    return total


# ---------------------------------- forward ----------------------------------------

def _auto_ll_forward_fused(params, x_row, x_col):
    """Entire forward in ONE pallas_call (weights resident in VMEM)."""
    M = x_row.shape[0]
    Mp = _ceil_to(M, _SUBLANE)

    if params["in"]:
        d0p = params["in"][0]["w_t"].shape[0]
        dl_true = params["in"][-1]["n_out"]
    else:
        d0p = params["out_first"]["w_top"].shape[0]
        dl_true = x_row.shape[1]
    dlp = params["out_first"]["w_top"].shape[0]
    if params["out_rest"]:
        epp = params["out_rest"][-1]["w_t"].shape[1]
        n_y = params["out_rest"][-1]["n_out"]
    else:
        epp = params["out_first"]["w_top"].shape[1]
        n_y = params["out_first"]["n_out"]

    x_row_p = jnp.pad(x_row, ((0, Mp - M), (0, d0p - x_row.shape[1])))
    x_col_p = jnp.pad(x_col, ((0, Mp - M), (0, d0p - x_col.shape[1])))

    flat = []
    for layer in params["in"]:
        flat += [layer["w_t"], layer["b"]]
    f = params["out_first"]
    flat += [f["w_top"], f["w_bot"], f["b"]]
    for layer in params["out_rest"]:
        flat += [layer["w_t"], layer["b"]]

    y_p, xr_p, xc_p = pl.pallas_call(
        _make_fused_net_kernel(len(params["in"]), len(params["out_rest"])),
        out_shape=(
            jax.ShapeDtypeStruct((Mp, epp), x_row.dtype),
            jax.ShapeDtypeStruct((Mp, dlp), x_row.dtype),
            jax.ShapeDtypeStruct((Mp, dlp), x_row.dtype),
        ),
    )(x_row_p, x_col_p, *flat)

    return y_p[:M, :n_y], xr_p[:M, :dl_true], xc_p[:M, :dl_true]


def _auto_ll_forward_layered(params, x_row, x_col):
    """Tiled fallback: one pallas_call per layer, x_row/x_col batched along M."""
    M = x_row.shape[0]
    # Shared weights: stack along M once, run each 'in' layer as ONE kernel call.
    x = jnp.concatenate([x_row, x_col], axis=0)
    for layer in params["in"]:
        x = matmul_bias_sigmoid([x], [layer["w_t"]], layer["b"], layer["n_out"])
    x_row, x_col = x[:M], x[M:]
    # First 'out' layer: implicit concat via two accumulating matmuls in one kernel.
    f = params["out_first"]
    y = matmul_bias_sigmoid([x_row, x_col], [f["w_top"], f["w_bot"]], f["b"], f["n_out"])
    for layer in params["out_rest"]:
        y = matmul_bias_sigmoid([y], [layer["w_t"]], layer["b"], layer["n_out"])
    return y, x_row, x_col


def auto_ll_forward(params, x_row, x_col, *, fuse_vmem_budget=4 * 1024 * 1024):
    """Pallas-backed AutoLL.forward -> (y, x_row, x_col)."""
    assert x_row.shape == x_col.shape
    if _fused_vmem_footprint(params, x_row.shape[0]) <= fuse_vmem_budget:
        return _auto_ll_forward_fused(params, x_row, x_col)
    return _auto_ll_forward_layered(params, x_row, x_col)


def auto_ll_forward_ref(params, x_row, x_col):
    """Pure-jnp reference (uses the unpadded slices of the stored weights)."""
    def ls(x, layer):
        w = layer["w_t"][:layer["n_in"], :layer["n_out"]].astype(jnp.float32)
        return jax.nn.sigmoid(x @ w + layer["b"][0, :layer["n_out"]])
    for layer in params["in"]:
        x_row = ls(x_row, layer)
        x_col = ls(x_col, layer)
    y = jnp.concatenate([x_row, x_col], axis=1)
    f = params["out_first"]
    w_full = jnp.concatenate(
        [f["w_top"][:f["n_in_half"], :f["n_out"]].astype(jnp.float32),
         f["w_bot"][:f["n_in_half"], :f["n_out"]].astype(jnp.float32)], axis=0)
    y = jax.nn.sigmoid(y @ w_full + f["b"][0, :f["n_out"]])
    for layer in params["out_rest"]:
        y = ls(y, layer)
    return y, x_row, x_col


if __name__ == "__main__":
    # layers_in: 32 -> 16 -> 8 (shared by x_row / x_col); concat -> 16; layers_out: 16 -> 8 -> 4.
    n_units_in = [32, 16, 8]
    n_units_out = [2 * n_units_in[-1], 8, 4]
    batch = 4

    key = jax.random.PRNGKey(0)
    key, kp, k1, k2 = jax.random.split(key, 4)
    params = init_auto_ll(kp, n_units_in, n_units_out)   # weight_dtype=jnp.bfloat16 for v6e/v7x MXU
    x_row = jax.random.normal(k1, (batch, n_units_in[0]), jnp.float32)
    x_col = jax.random.normal(k2, (batch, n_units_in[0]), jnp.float32)

    y_ref, xr_ref, xc_ref = auto_ll_forward_ref(params, x_row, x_col)

    # 1) Fully-fused single-kernel path (the one selected for these tiny shapes).
    y, xr, xc = auto_ll_forward(params, x_row, x_col)
    jax.block_until_ready((y, xr, xc))
    np.testing.assert_allclose(np.asarray(xr), np.asarray(xr_ref), rtol=1e-5, atol=1e-5)
    np.testing.assert_allclose(np.asarray(xc), np.asarray(xc_ref), rtol=1e-5, atol=1e-5)
    np.testing.assert_allclose(np.asarray(y), np.asarray(y_ref), rtol=1e-5, atol=1e-5)

    # 2) Tiled per-layer fallback path (used for large layer widths).
    y2, xr2, xc2 = _auto_ll_forward_layered(params, x_row, x_col)
    jax.block_until_ready((y2, xr2, xc2))
    np.testing.assert_allclose(np.asarray(xr2), np.asarray(xr_ref), rtol=1e-5, atol=1e-5)
    np.testing.assert_allclose(np.asarray(xc2), np.asarray(xc_ref), rtol=1e-5, atol=1e-5)
    np.testing.assert_allclose(np.asarray(y2), np.asarray(y_ref), rtol=1e-5, atol=1e-5)

    print("KERNEL_OK")
</pallas_src>

<mosaic_0001>
module attributes {stable_mosaic.version = 11 : i64} {
  func.func @kernel(%arg0: memref<8x128xf32, #tpu.memory_space<vmem>>, %arg1: memref<8x128xf32, #tpu.memory_space<vmem>>, %arg2: memref<128x128xf32, #tpu.memory_space<vmem>>, %arg3: memref<1x128xf32, #tpu.memory_space<vmem>>, %arg4: memref<128x128xf32, #tpu.memory_space<vmem>>, %arg5: memref<1x128xf32, #tpu.memory_space<vmem>>, %arg6: memref<128x128xf32, #tpu.memory_space<vmem>>, %arg7: memref<128x128xf32, #tpu.memory_space<vmem>>, %arg8: memref<1x128xf32, #tpu.memory_space<vmem>>, %arg9: memref<128x128xf32, #tpu.memory_space<vmem>>, %arg10: memref<1x128xf32, #tpu.memory_space<vmem>>, %arg11: memref<8x128xf32, #tpu.memory_space<vmem>>, %arg12: memref<8x128xf32, #tpu.memory_space<vmem>>, %arg13: memref<8x128xf32, #tpu.memory_space<vmem>>) attributes {dimension_semantics = [], scalar_prefetch = 0 : i64, scratch_operands = 0 : i64, tpu.core_type = #tpu.core_type<tc>} {
    %c0 = arith.constant 0 : index
    %c0_0 = arith.constant 0 : index
    %0 = vector.load %arg0[%c0, %c0_0] : memref<8x128xf32, #tpu.memory_space<vmem>>, vector<8x128xf32>
    %c0_1 = arith.constant 0 : index
    %c0_2 = arith.constant 0 : index
    %1 = vector.load %arg1[%c0_1, %c0_2] : memref<8x128xf32, #tpu.memory_space<vmem>>, vector<8x128xf32>
    %c0_3 = arith.constant 0 : index
    %c0_4 = arith.constant 0 : index
    %2 = vector.load %arg2[%c0_3, %c0_4] : memref<128x128xf32, #tpu.memory_space<vmem>>, vector<128x128xf32>
    %c0_5 = arith.constant 0 : index
    %c0_6 = arith.constant 0 : index
    %3 = vector.load %arg3[%c0_5, %c0_6] : memref<1x128xf32, #tpu.memory_space<vmem>>, vector<1x128xf32>
    %cst = arith.constant dense<0.000000e+00> : vector<8x128xf32>
    %4 = tpu.matmul %0, %2, %cst {dimension_numbers = #tpu.dot_dimension_numbers<[1], [0], [0], [1], [0, 0, 1, 1], [], []>} : vector<8x128xf32>, vector<128x128xf32>, vector<8x128xf32> -> vector<8x128xf32>
    %5 = vector.broadcast %3 : vector<1x128xf32> to vector<8x128xf32>
    %6 = arith.addf %4, %5 : vector<8x128xf32>
    %cst_7 = arith.constant 0.000000e+00 : f32
    %7 = vector.broadcast %cst_7 : f32 to vector<8x128xf32>
    %8 = arith.subf %7, %6 : vector<8x128xf32>
    %9 = math.exp %8 : vector<8x128xf32>
    %cst_8 = arith.constant 1.000000e+00 : f32
    %10 = vector.broadcast %cst_8 : f32 to vector<8x128xf32>
    %11 = arith.addf %10, %9 : vector<8x128xf32>
    %12 = tpu.reciprocal %11 : vector<8x128xf32> -> vector<8x128xf32>
    %cst_9 = arith.constant dense<0.000000e+00> : vector<8x128xf32>
    %13 = tpu.matmul %1, %2, %cst_9 {dimension_numbers = #tpu.dot_dimension_numbers<[1], [0], [0], [1], [0, 0, 1, 1], [], []>} : vector<8x128xf32>, vector<128x128xf32>, vector<8x128xf32> -> vector<8x128xf32>
    %14 = vector.broadcast %3 : vector<1x128xf32> to vector<8x128xf32>
    %15 = arith.addf %13, %14 : vector<8x128xf32>
    %cst_10 = arith.constant 0.000000e+00 : f32
    %16 = vector.broadcast %cst_10 : f32 to vector<8x128xf32>
    %17 = arith.subf %16, %15 : vector<8x128xf32>
    %18 = math.exp %17 : vector<8x128xf32>
    %cst_11 = arith.constant 1.000000e+00 : f32
    %19 = vector.broadcast %cst_11 : f32 to vector<8x128xf32>
    %20 = arith.addf %19, %18 : vector<8x128xf32>
    %21 = tpu.reciprocal %20 : vector<8x128xf32> -> vector<8x128xf32>
    %c0_12 = arith.constant 0 : index
    %c0_13 = arith.constant 0 : index
    %22 = vector.load %arg4[%c0_12, %c0_13] : memref<128x128xf32, #tpu.memory_space<vmem>>, vector<128x128xf32>
    %c0_14 = arith.constant 0 : index
    %c0_15 = arith.constant 0 : index
    %23 = vector.load %arg5[%c0_14, %c0_15] : memref<1x128xf32, #tpu.memory_space<vmem>>, vector<1x128xf32>
    %cst_16 = arith.constant dense<0.000000e+00> : vector<8x128xf32>
    %24 = tpu.matmul %12, %22, %cst_16 {dimension_numbers = #tpu.dot_dimension_numbers<[1], [0], [0], [1], [0, 0, 1, 1], [], []>} : vector<8x128xf32>, vector<128x128xf32>, vector<8x128xf32> -> vector<8x128xf32>
    %25 = vector.broadcast %23 : vector<1x128xf32> to vector<8x128xf32>
    %26 = arith.addf %24, %25 : vector<8x128xf32>
    %cst_17 = arith.constant 0.000000e+00 : f32
    %27 = vector.broadcast %cst_17 : f32 to vector<8x128xf32>
    %28 = arith.subf %27, %26 : vector<8x128xf32>
    %29 = math.exp %28 : vector<8x128xf32>
    %cst_18 = arith.constant 1.000000e+00 : f32
    %30 = vector.broadcast %cst_18 : f32 to vector<8x128xf32>
    %31 = arith.addf %30, %29 : vector<8x128xf32>
    %32 = tpu.reciprocal %31 : vector<8x128xf32> -> vector<8x128xf32>
    %cst_19 = arith.constant dense<0.000000e+00> : vector<8x128xf32>
    %33 = tpu.matmul %21, %22, %cst_19 {dimension_numbers = #tpu.dot_dimension_numbers<[1], [0], [0], [1], [0, 0, 1, 1], [], []>} : vector<8x128xf32>, vector<128x128xf32>, vector<8x128xf32> -> vector<8x128xf32>
    %34 = vector.broadcast %23 : vector<1x128xf32> to vector<8x128xf32>
    %35 = arith.addf %33, %34 : vector<8x128xf32>
    %cst_20 = arith.constant 0.000000e+00 : f32
    %36 = vector.broadcast %cst_20 : f32 to vector<8x128xf32>
    %37 = arith.subf %36, %35 : vector<8x128xf32>
    %38 = math.exp %37 : vector<8x128xf32>
    %cst_21 = arith.constant 1.000000e+00 : f32
    %39 = vector.broadcast %cst_21 : f32 to vector<8x128xf32>
    %40 = arith.addf %39, %38 : vector<8x128xf32>
    %41 = tpu.reciprocal %40 : vector<8x128xf32> -> vector<8x128xf32>
    %c0_22 = arith.constant 0 : index
    %c0_23 = arith.constant 0 : index
    %42 = vector.load %arg6[%c0_22, %c0_23] : memref<128x128xf32, #tpu.memory_space<vmem>>, vector<128x128xf32>
    %c0_24 = arith.constant 0 : index
    %c0_25 = arith.constant 0 : index
    %43 = vector.load %arg7[%c0_24, %c0_25] : memref<128x128xf32, #tpu.memory_space<vmem>>, vector<128x128xf32>
    %c0_26 = arith.constant 0 : index
    %c0_27 = arith.constant 0 : index
    %44 = vector.load %arg8[%c0_26, %c0_27] : memref<1x128xf32, #tpu.memory_space<vmem>>, vector<1x128xf32>
    %cst_28 = arith.constant dense<0.000000e+00> : vector<8x128xf32>
    %45 = tpu.matmul %32, %42, %cst_28 {dimension_numbers = #tpu.dot_dimension_numbers<[1], [0], [0], [1], [0, 0, 1, 1], [], []>} : vector<8x128xf32>, vector<128x128xf32>, vector<8x128xf32> -> vector<8x128xf32>
    %cst_29 = arith.constant dense<0.000000e+00> : vector<8x128xf32>
    %46 = tpu.matmul %41, %43, %cst_29 {dimension_numbers = #tpu.dot_dimension_numbers<[1], [0], [0], [1], [0, 0, 1, 1], [], []>} : vector<8x128xf32>, vector<128x128xf32>, vector<8x128xf32> -> vector<8x128xf32>
    %47 = arith.addf %45, %46 : vector<8x128xf32>
    %48 = vector.broadcast %44 : vector<1x128xf32> to vector<8x128xf32>
    %49 = arith.addf %47, %48 : vector<8x128xf32>
    %cst_30 = arith.constant 0.000000e+00 : f32
    %50 = vector.broadcast %cst_30 : f32 to vector<8x128xf32>
    %51 = arith.subf %50, %49 : vector<8x128xf32>
    %52 = math.exp %51 : vector<8x128xf32>
    %cst_31 = arith.constant 1.000000e+00 : f32
    %53 = vector.broadcast %cst_31 : f32 to vector<8x128xf32>
    %54 = arith.addf %53, %52 : vector<8x128xf32>
    %55 = tpu.reciprocal %54 : vector<8x128xf32> -> vector<8x128xf32>
    %c0_32 = arith.constant 0 : index
    %c0_33 = arith.constant 0 : index
    %56 = vector.load %arg9[%c0_32, %c0_33] : memref<128x128xf32, #tpu.memory_space<vmem>>, vector<128x128xf32>
    %c0_34 = arith.constant 0 : index
    %c0_35 = arith.constant 0 : index
    %57 = vector.load %arg10[%c0_34, %c0_35] : memref<1x128xf32, #tpu.memory_space<vmem>>, vector<1x128xf32>
    %cst_36 = arith.constant dense<0.000000e+00> : vector<8x128xf32>
    %58 = tpu.matmul %55, %56, %cst_36 {dimension_numbers = #tpu.dot_dimension_numbers<[1], [0], [0], [1], [0, 0, 1, 1], [], []>} : vector<8x128xf32>, vector<128x128xf32>, vector<8x128xf32> -> vector<8x128xf32>
    %59 = vector.broadcast %57 : vector<1x128xf32> to vector<8x128xf32>
    %60 = arith.addf %58, %59 : vector<8x128xf32>
    %cst_37 = arith.constant 0.000000e+00 : f32
    %61 = vector.broadcast %cst_37 : f32 to vector<8x128xf32>
    %62 = arith.subf %61, %60 : vector<8x128xf32>
    %63 = math.exp %62 : vector<8x128xf32>
    %cst_38 = arith.constant 1.000000e+00 : f32
    %64 = vector.broadcast %cst_38 : f32 to vector<8x128xf32>
    %65 = arith.addf %64, %63 : vector<8x128xf32>
    %66 = tpu.reciprocal %65 : vector<8x128xf32> -> vector<8x128xf32>
    %c0_39 = arith.constant 0 : index
    %c0_40 = arith.constant 0 : index
    %67 = vector.load %arg11[%c0_39, %c0_40] : memref<8x128xf32, #tpu.memory_space<vmem>>, vector<8x128xf32>
    tpu.vector_store %arg11[%c0_39, %c0_40], %66 {strides = array<i32>} : memref<8x128xf32, #tpu.memory_space<vmem>>, vector<8x128xf32>,
    %c0_41 = arith.constant 0 : index
    %c0_42 = arith.constant 0 : index
    %68 = vector.load %arg12[%c0_41, %c0_42] : memref<8x128xf32, #tpu.memory_space<vmem>>, vector<8x128xf32>
    tpu.vector_store %arg12[%c0_41, %c0_42], %32 {strides = array<i32>} : memref<8x128xf32, #tpu.memory_space<vmem>>, vector<8x128xf32>,
    %c0_43 = arith.constant 0 : index
    %c0_44 = arith.constant 0 : index
    %69 = vector.load %arg13[%c0_43, %c0_44] : memref<8x128xf32, #tpu.memory_space<vmem>>, vector<8x128xf32>
    tpu.vector_store %arg13[%c0_43, %c0_44], %41 {strides = array<i32>} : memref<8x128xf32, #tpu.memory_space<vmem>>, vector<8x128xf32>,
    return
  }
}

</mosaic_0001>

<llo_original>
// kernel: tpu_custom_call.1
$region0: #{tpu_custom_call.1}
  #allocation0 [shape = 'u32[]', space=smem, size = 0x4, offset = 0x4, fixed_abs, tag = 'smem constant byte address 0x4 - core index']
  #allocation1 [shape = 'u32[72,128]{1,0:T(1,128)}', space=vmem, size = 0x9000, scoped, tag = 'internal scratch']
  %s0 = inlined_call_operand.hbm [shape: f32[8,128], index: 0, kind: input, shape index: {}]
  %s1 = inlined_call_operand.hbm [shape: f32[8,128], index: 1, kind: input, shape index: {}]
  %s2 = inlined_call_operand.hbm [shape: f32[128,128], index: 2, kind: input, shape index: {}]
  %s3 = inlined_call_operand.vmem [shape: f32[1,128], index: 3, kind: input, shape index: {}]
  %s4 = inlined_call_operand.hbm [shape: f32[128,128], index: 4, kind: input, shape index: {}]
  %s5 = inlined_call_operand.vmem [shape: f32[1,128], index: 5, kind: input, shape index: {}]
  %s6 = inlined_call_operand.hbm [shape: f32[128,128], index: 6, kind: input, shape index: {}]
  %s7 = inlined_call_operand.hbm [shape: f32[128,128], index: 7, kind: input, shape index: {}]
  %s8 = inlined_call_operand.vmem [shape: f32[1,128], index: 8, kind: input, shape index: {}]
  %s9 = inlined_call_operand.hbm [shape: f32[128,128], index: 9, kind: input, shape index: {}]
  %s10 = inlined_call_operand.vmem [shape: f32[1,128], index: 10, kind: input, shape index: {}]
  %s11 = inlined_call_operand.hbm [shape: f32[8,128], index: 11, kind: output, shape index: {0}]
  %s12 = inlined_call_operand.hbm [shape: f32[8,128], index: 12, kind: output, shape index: {1}]
  %s13 = inlined_call_operand.hbm [shape: f32[8,128], index: 13, kind: output, shape index: {2}]
  %14 = xla_tuple %s11, %s12, %s13
  %s15 = sld [smem:[#allocation0]]
  $region98: #{tpu_custom_call.1} parent=0
    _
  %s17 = ssub.s32 1, %s15
  %s18 = scalar_select 0, %s17, %s15
  $region1: #{tpu_custom_call.1} parent=0
    #allocation2 [shape = 'u8[4096]{0}', space=vmem, size = 0x1000, scoped, tag = 'input window, operand 0, single buffered']
    #allocation3 [shape = 's32[1]{0}', space=sflag, size = 0x4, scoped, tag = 'scoped memory for tpu_custom_call.1']
    #allocation4 [shape = 's32[1]{0}', space=sflag, size = 0x4, scoped, tag = 'scoped memory for tpu_custom_call.1']
    #allocation5 [shape = 'u8[4096]{0}', space=vmem, size = 0x1000, scoped, tag = 'input window, operand 1, single buffered']
    #allocation6 [shape = 's32[1]{0}', space=sflag, size = 0x4, scoped, tag = 'scoped memory for tpu_custom_call.1']
    #allocation7 [shape = 'u8[65536]{0}', space=vmem, size = 0x10000, scoped, tag = 'input window, operand 2, single buffered']
    #allocation8 [shape = 'u8[65536]{0}', space=vmem, size = 0x10000, scoped, tag = 'input window, operand 4, single buffered']
    #allocation9 [shape = 's32[1]{0}', space=sflag, size = 0x4, scoped, tag = 'scoped memory for tpu_custom_call.1']
    #allocation10 [shape = 'u8[65536]{0}', space=vmem, size = 0x10000, scoped, tag = 'input window, operand 6, single buffered']
    #allocation11 [shape = 'u8[65536]{0}', space=vmem, size = 0x10000, scoped, tag = 'input window, operand 7, single buffered']
    #allocation12 [shape = 's32[1]{0}', space=sflag, size = 0x4, scoped, tag = 'scoped memory for tpu_custom_call.1']
    #allocation13 [shape = 'u8[65536]{0}', space=vmem, size = 0x10000, scoped, tag = 'input window, operand 9, single buffered']
    #allocation14 [shape = 'u8[4096]{0}', space=vmem, size = 0x1000, scoped, tag = 'output window, operand 0, single buffered']
    #allocation15 [shape = 'u8[4096]{0}', space=vmem, size = 0x1000, scoped, tag = 'output window, operand 1, single buffered']
    #allocation16 [shape = 's32[1]{0}', space=sflag, size = 0x4, scoped, tag = 'scoped memory for tpu_custom_call.1']
    #allocation17 [shape = 'u8[4096]{0}', space=vmem, size = 0x1000, scoped, tag = 'output window, operand 2, single buffered']
    %19 = vsyncpa [#allocation3], 0
    %20 = vsyncpa [#allocation6], 0
    %21 = vsyncpa [#allocation9], 0
    %22 = vsyncpa [#allocation12], 0
    %23 = vsyncpa [#allocation4], 0
    %24 = vsyncpa [#allocation16], 0
    // Predicated region
    $region2: #{tpu_custom_call.1} parent=1 // pred_check
      _
    $region3: #{tpu_custom_call.1} parent=1 // pred_check_branch
      %26 = sbr.rel (0) target = $region5
    $region4: #{tpu_custom_call.1} parent=1 // pred_region
      %28 = vsyncadd [#allocation3], 0
      %s30 = sshll.u32 %s0, 4
      %s31 = int_to_ptr.hbm [resolvable:$true] %s30
      %s32 = sshll.u32 [#allocation2], 4
      %s33 = int_to_ptr.vmem [resolvable:$true] %s32
      %35 = dma.hbm_to_vmem [thread:$0]  %s31, 128, %s33, [#allocation3]
    $region5: #{tpu_custom_call.1} parent=1 // pred_fallthru
      _
    // Predicated region
    $region6: #{tpu_custom_call.1} parent=1 // pred_check
      _
    $region7: #{tpu_custom_call.1} parent=1 // pred_check_branch
      %37 = sbr.rel (0) target = $region9
    $region8: #{tpu_custom_call.1} parent=1 // pred_region
      %39 = vsyncadd [#allocation6], 0
      %s41 = sshll.u32 %s1, 4
      %s42 = int_to_ptr.hbm [resolvable:$true] %s41
      %s43 = sshll.u32 [#allocation5], 4
      %s44 = int_to_ptr.vmem [resolvable:$true] %s43
      %46 = dma.hbm_to_vmem [thread:$0]  %s42, 128, %s44, [#allocation6]
    $region9: #{tpu_custom_call.1} parent=1 // pred_fallthru
      _
    // Predicated region
    $region10: #{tpu_custom_call.1} parent=1 // pred_check
      _
    $region11: #{tpu_custom_call.1} parent=1 // pred_check_branch
      %48 = sbr.rel (0) target = $region13
    $region12: #{tpu_custom_call.1} parent=1 // pred_region
      %50 = vsyncadd [#allocation6], 0
      %s51 = sshll.u32 %s2, 4
      %s52 = int_to_ptr.hbm [resolvable:$true] %s51
      %s53 = sshll.u32 [#allocation7], 4
      %s54 = int_to_ptr.vmem [resolvable:$true] %s53
      %59 = dma.hbm_to_vmem [thread:$0]  %s52, 2048, %s54, [#allocation6], 128, 128, 8
    $region13: #{tpu_custom_call.1} parent=1 // pred_fallthru
      _
    // Predicated region
    $region14: #{tpu_custom_call.1} parent=1 // pred_check
      _
    $region15: #{tpu_custom_call.1} parent=1 // pred_check_branch
      %61 = sbr.rel (0) target = $region17
    $region16: #{tpu_custom_call.1} parent=1 // pred_region
      _
    $region17: #{tpu_custom_call.1} parent=1 // pred_fallthru
      _
    // Predicated region
    $region18: #{tpu_custom_call.1} parent=1 // pred_check
      _
    $region19: #{tpu_custom_call.1} parent=1 // pred_check_branch
      %63 = sbr.rel (0) target = $region21
    $region20: #{tpu_custom_call.1} parent=1 // pred_region
      %65 = vsyncadd [#allocation9], 0
      %s66 = sshll.u32 %s4, 4
      %s67 = int_to_ptr.hbm [resolvable:$true] %s66
      %s68 = sshll.u32 [#allocation8], 4
      %s69 = int_to_ptr.vmem [resolvable:$true] %s68
      %74 = dma.hbm_to_vmem [thread:$0]  %s67, 2048, %s69, [#allocation9], 128, 128, 8
    $region21: #{tpu_custom_call.1} parent=1 // pred_fallthru
      _
    // Predicated region
    $region22: #{tpu_custom_call.1} parent=1 // pred_check
      _
    $region23: #{tpu_custom_call.1} parent=1 // pred_check_branch
      %76 = sbr.rel (0) target = $region25
    $region24: #{tpu_custom_call.1} parent=1 // pred_region
      _
    $region25: #{tpu_custom_call.1} parent=1 // pred_fallthru
      _
    // Predicated region
    $region26: #{tpu_custom_call.1} parent=1 // pred_check
      _
    $region27: #{tpu_custom_call.1} parent=1 // pred_check_branch
      %78 = sbr.rel (0) target = $region29
    $region28: #{tpu_custom_call.1} parent=1 // pred_region
      %80 = vsyncadd [#allocation9], 0
      %s81 = sshll.u32 %s6, 4
      %s82 = int_to_ptr.hbm [resolvable:$true] %s81
      %s83 = sshll.u32 [#allocation10], 4
      %s84 = int_to_ptr.vmem [resolvable:$true] %s83
      %89 = dma.hbm_to_vmem [thread:$0]  %s82, 2048, %s84, [#allocation9], 128, 128, 8
    $region29: #{tpu_custom_call.1} parent=1 // pred_fallthru
      _
    // Predicated region
    $region30: #{tpu_custom_call.1} parent=1 // pred_check
      _
    $region31: #{tpu_custom_call.1} parent=1 // pred_check_branch
      %91 = sbr.rel (0) target = $region33
    $region32: #{tpu_custom_call.1} parent=1 // pred_region
      %93 = vsyncadd [#allocation12], 0
      %s94 = sshll.u32 %s7, 4
      %s95 = int_to_ptr.hbm [resolvable:$true] %s94
      %s96 = sshll.u32 [#allocation11], 4
      %s97 = int_to_ptr.vmem [resolvable:$true] %s96
      %102 = dma.hbm_to_vmem [thread:$0]  %s95, 2048, %s97, [#allocation12], 128, 128, 8
    $region33: #{tpu_custom_call.1} parent=1 // pred_fallthru
      _
    // Predicated region
    $region34: #{tpu_custom_call.1} parent=1 // pred_check
      _
    $region35: #{tpu_custom_call.1} parent=1 // pred_check_branch
      %104 = sbr.rel (0) target = $region37
    $region36: #{tpu_custom_call.1} parent=1 // pred_region
      _
    $region37: #{tpu_custom_call.1} parent=1 // pred_fallthru
      _
    // Predicated region
    $region38: #{tpu_custom_call.1} parent=1 // pred_check
      _
    $region39: #{tpu_custom_call.1} parent=1 // pred_check_branch
      %106 = sbr.rel (0) target = $region41
    $region40: #{tpu_custom_call.1} parent=1 // pred_region
      %108 = vsyncadd [#allocation12], 0
      %s109 = sshll.u32 %s9, 4
      %s110 = int_to_ptr.hbm [resolvable:$true] %s109
      %s111 = sshll.u32 [#allocation13], 4
      %s112 = int_to_ptr.vmem [resolvable:$true] %s111
      %117 = dma.hbm_to_vmem [thread:$0]  %s110, 2048, %s112, [#allocation12], 128, 128, 8
    $region41: #{tpu_custom_call.1} parent=1 // pred_fallthru
      _
    // Predicated region
    $region42: #{tpu_custom_call.1} parent=1 // pred_check
      _
    $region43: #{tpu_custom_call.1} parent=1 // pred_check_branch
      %119 = sbr.rel (0) target = $region45
    $region44: #{tpu_custom_call.1} parent=1 // pred_region
      _
    $region45: #{tpu_custom_call.1} parent=1 // pred_fallthru
      _
    // Predicated region
    $region46: #{tpu_custom_call.1} parent=1 // pred_check
      _
    $region47: #{tpu_custom_call.1} parent=1 // pred_check_branch
      %121 = sbr.rel (0) target = $region49
    $region48: #{tpu_custom_call.1} parent=1 // pred_region
      %123 = dma.done [#allocation3], 128
    $region49: #{tpu_custom_call.1} parent=1 // pred_fallthru
      _
    // Predicated region
    $region50: #{tpu_custom_call.1} parent=1 // pred_check
      _
    $region51: #{tpu_custom_call.1} parent=1 // pred_check_branch
      %125 = sbr.rel (0) target = $region53
    $region52: #{tpu_custom_call.1} parent=1 // pred_region
      %127 = dma.done [#allocation6], 128
    $region53: #{tpu_custom_call.1} parent=1 // pred_fallthru
      _
    // Predicated region
    $region54: #{tpu_custom_call.1} parent=1 // pred_check
      _
    $region55: #{tpu_custom_call.1} parent=1 // pred_check_branch
      %129 = sbr.rel (0) target = $region57
    $region56: #{tpu_custom_call.1} parent=1 // pred_region
      %131 = dma.done [#allocation6], 2048
    $region57: #{tpu_custom_call.1} parent=1 // pred_fallthru
      _
    // Predicated region
    $region58: #{tpu_custom_call.1} parent=1 // pred_check
      _
    $region59: #{tpu_custom_call.1} parent=1 // pred_check_branch
      %133 = sbr.rel (0) target = $region61
    $region60: #{tpu_custom_call.1} parent=1 // pred_region
      %135 = dma.done [#allocation9], 2048
    $region61: #{tpu_custom_call.1} parent=1 // pred_fallthru
      _
    // Predicated region
    $region62: #{tpu_custom_call.1} parent=1 // pred_check
      _
    $region63: #{tpu_custom_call.1} parent=1 // pred_check_branch
      %137 = sbr.rel (0) target = $region65
    $region64: #{tpu_custom_call.1} parent=1 // pred_region
      %139 = dma.done [#allocation9], 2048
    $region65: #{tpu_custom_call.1} parent=1 // pred_fallthru
      _
    // Predicated region
    $region66: #{tpu_custom_call.1} parent=1 // pred_check
      _
    $region67: #{tpu_custom_call.1} parent=1 // pred_check_branch
      %141 = sbr.rel (0) target = $region69
    $region68: #{tpu_custom_call.1} parent=1 // pred_region
      %143 = dma.done [#allocation12], 2048
    $region69: #{tpu_custom_call.1} parent=1 // pred_fallthru
      _
    // Predicated region
    $region70: #{tpu_custom_call.1} parent=1 // pred_check
      _
    $region71: #{tpu_custom_call.1} parent=1 // pred_check_branch
      %145 = sbr.rel (0) target = $region73
    $region72: #{tpu_custom_call.1} parent=1 // pred_region
      %147 = dma.done [#allocation12], 2048
    $region73: #{tpu_custom_call.1} parent=1 // pred_fallthru
      _
    %v148 = vld [vmem:[#allocation2] sm:$0xff]
    %v149 = vld [vmem:[#allocation5] sm:$0xff]
    %v150 = vld [vmem:[#allocation7] sm:$0xff]
    %v151 = vld [vmem:[#allocation7 + $0x8] sm:$0xff]
    %v152 = vld [vmem:[#allocation7 + $0x10] sm:$0xff]
    %v153 = vld [vmem:[#allocation7 + $0x18] sm:$0xff]
    %v154 = vld [vmem:[#allocation7 + $0x20] sm:$0xff]
    %v155 = vld [vmem:[#allocation7 + $0x28] sm:$0xff]
    %v156 = vld [vmem:[#allocation7 + $0x30] sm:$0xff]
    %v157 = vld [vmem:[#allocation7 + $0x38] sm:$0xff]
    %v158 = vld [vmem:[#allocation7 + $0x40] sm:$0xff]
    %v159 = vld [vmem:[#allocation7 + $0x48] sm:$0xff]
    %v160 = vld [vmem:[#allocation7 + $0x50] sm:$0xff]
    %v161 = vld [vmem:[#allocation7 + $0x58] sm:$0xff]
    %v162 = vld [vmem:[#allocation7 + $0x60] sm:$0xff]
    %v163 = vld [vmem:[#allocation7 + $0x68] sm:$0xff]
    %v164 = vld [vmem:[#allocation7 + $0x70] sm:$0xff]
    %v165 = vld [vmem:[#allocation7 + $0x78] sm:$0xff]
    %v166 = vld [vmem:[%s3] sm:$0x1]
    %v168 = vperm.slane %v166, 0
    %170 = vmatpush.msra.mxu0 %v165
    %171 = vmatpush.msra.mxu0 %v164
    %172 = vmatpush.msra.mxu0 %v163
    %173 = vmatpush.msra.mxu0 %v162
    %174 = vmatpush.msra.mxu0 %v161
    %175 = vmatpush.msra.mxu0 %v160
    %176 = vmatpush.msra.mxu0 %v159
    %177 = vmatpush.msra.mxu0 %v158
    %178 = vmatpush.msra.mxu0 %v157
    %179 = vmatpush.msra.mxu0 %v156
    %180 = vmatpush.msra.mxu0 %v155
    %181 = vmatpush.msra.mxu0 %v154
    %182 = vmatpush.msra.mxu0 %v153
    %183 = vmatpush.msra.mxu0 %v152
    %184 = vmatpush.msra.mxu0 %v151
    %185 = vmatpush.msra.mxu0 %v150
    %186 = vmatmul.f32.gmra.mxu0 %v148
    %v187 = vpop.f32.mrf.mxu0
    %v188 = vadd.f32 %v168, %v187
    %189 = vdwg.mxu0
    %v190 = vsub.f32 0.0, %v188
    %v191 = vmul.f32 %v190, 1.442695
    %v192 = vpow.pop %v191
    %v193 = vadd.f32 %v192, 1.0
    %v194 = vrcp.pop %v193
    %v195 = vmul.f32 %v193, %v194
    %v196 = vsub.f32 1.0, %v195
    %v197 = vmul.f32 %v194, %v196
    %v198 = vadd.f32 %v194, %v197
    %vm199 = vweird.f32 %v193
    %vm200 = vweird.f32 %v194
    %vm201 = vmor %vm199, %vm200
    %v202 = vsel %vm201, %v194, %v198
    %v203 = vand.u32 2147483647, %v193
    %vm204 = vcmp.eq.f32.partialorder %v203, 8.507059e+37
    %v205 = vand.u32 %v193, 2147483648
    %v206 = vor.u32 1.1754944e-38, %v205
    %v207 = vsel %vm204, %v206, %v202
    %208 = vmatpush.msra.mxu0 %v165
    %209 = vmatpush.msra.mxu0 %v164
    %210 = vmatpush.msra.mxu0 %v163
    %211 = vmatpush.msra.mxu0 %v162
    %212 = vmatpush.msra.mxu0 %v161
    %213 = vmatpush.msra.mxu0 %v160
    %214 = vmatpush.msra.mxu0 %v159
    %215 = vmatpush.msra.mxu0 %v158
    %216 = vmatpush.msra.mxu0 %v157
    %217 = vmatpush.msra.mxu0 %v156
    %218 = vmatpush.msra.mxu0 %v155
    %219 = vmatpush.msra.mxu0 %v154
    %220 = vmatpush.msra.mxu0 %v153
    %221 = vmatpush.msra.mxu0 %v152
    %222 = vmatpush.msra.mxu0 %v151
    %223 = vmatpush.msra.mxu0 %v150
    %224 = vmatmul.f32.gmra.mxu0 %v149
    %v225 = vpop.f32.mrf.mxu0
    %v226 = vadd.f32 %v168, %v225
    %227 = vdwg.mxu0
    %v228 = vsub.f32 0.0, %v226
    %v229 = vmul.f32 %v228, 1.442695
    %v230 = vpow.pop %v229
    %v231 = vadd.f32 %v230, 1.0
    %v232 = vrcp.pop %v231
    %v233 = vmul.f32 %v231, %v232
    %v234 = vsub.f32 1.0, %v233
    %v235 = vmul.f32 %v232, %v234
    %v236 = vadd.f32 %v232, %v235
    %vm237 = vweird.f32 %v231
    %vm238 = vweird.f32 %v232
    %vm239 = vmor %vm237, %vm238
    %v240 = vsel %vm239, %v232, %v236
    %v241 = vand.u32 2147483647, %v231
    %vm242 = vcmp.eq.f32.partialorder %v241, 8.507059e+37
    %v243 = vand.u32 %v231, 2147483648
    %v244 = vor.u32 1.1754944e-38, %v243
    %v245 = vsel %vm242, %v244, %v240
    %v246 = vld [vmem:[#allocation8] sm:$0xff]
    %v247 = vld [vmem:[#allocation8 + $0x8] sm:$0xff]
    %v248 = vld [vmem:[#allocation8 + $0x10] sm:$0xff]
    %v249 = vld [vmem:[#allocation8 + $0x18] sm:$0xff]
    %v250 = vld [vmem:[#allocation8 + $0x20] sm:$0xff]
    %v251 = vld [vmem:[#allocation8 + $0x28] sm:$0xff]
    %v252 = vld [vmem:[#allocation8 + $0x30] sm:$0xff]
    %v253 = vld [vmem:[#allocation8 + $0x38] sm:$0xff]
    %v254 = vld [vmem:[#allocation8 + $0x40] sm:$0xff]
    %v255 = vld [vmem:[#allocation8 + $0x48] sm:$0xff]
    %v256 = vld [vmem:[#allocation8 + $0x50] sm:$0xff]
    %v257 = vld [vmem:[#allocation8 + $0x58] sm:$0xff]
    %v258 = vld [vmem:[#allocation8 + $0x60] sm:$0xff]
    %v259 = vld [vmem:[#allocation8 + $0x68] sm:$0xff]
    %v260 = vld [vmem:[#allocation8 + $0x70] sm:$0xff]
    %v261 = vld [vmem:[#allocation8 + $0x78] sm:$0xff]
    %v262 = vld [vmem:[%s5] sm:$0x1]
    %v264 = vperm.slane %v262, 0
    %266 = vmatpush.msra.mxu0 %v261
    %267 = vmatpush.msra.mxu0 %v260
    %268 = vmatpush.msra.mxu0 %v259
    %269 = vmatpush.msra.mxu0 %v258
    %270 = vmatpush.msra.mxu0 %v257
    %271 = vmatpush.msra.mxu0 %v256
    %272 = vmatpush.msra.mxu0 %v255
    %273 = vmatpush.msra.mxu0 %v254
    %274 = vmatpush.msra.mxu0 %v253
    %275 = vmatpush.msra.mxu0 %v252
    %276 = vmatpush.msra.mxu0 %v251
    %277 = vmatpush.msra.mxu0 %v250
    %278 = vmatpush.msra.mxu0 %v249
    %279 = vmatpush.msra.mxu0 %v248
    %280 = vmatpush.msra.mxu0 %v247
    %281 = vmatpush.msra.mxu0 %v246
    %282 = vmatmul.f32.gmra.mxu0 %v207
    %v283 = vpop.f32.mrf.mxu0
    %v284 = vadd.f32 %v264, %v283
    %285 = vdwg.mxu0
    %v286 = vsub.f32 0.0, %v284
    %v287 = vmul.f32 %v286, 1.442695
    %v288 = vpow.pop %v287
    %v289 = vadd.f32 %v288, 1.0
    %v290 = vrcp.pop %v289
    %v291 = vmul.f32 %v289, %v290
    %v292 = vsub.f32 1.0, %v291
    %v293 = vmul.f32 %v290, %v292
    %v294 = vadd.f32 %v290, %v293
    %vm295 = vweird.f32 %v289
    %vm296 = vweird.f32 %v290
    %vm297 = vmor %vm295, %vm296
    %v298 = vsel %vm297, %v290, %v294
    %v299 = vand.u32 2147483647, %v289
    %vm300 = vcmp.eq.f32.partialorder %v299, 8.507059e+37
    %v301 = vand.u32 %v289, 2147483648
    %v302 = vor.u32 1.1754944e-38, %v301
    %v303 = vsel %vm300, %v302, %v298
    %304 = vmatpush.msra.mxu0 %v261
    %305 = vmatpush.msra.mxu0 %v260
    %306 = vmatpush.msra.mxu0 %v259
    %307 = vmatpush.msra.mxu0 %v258
    %308 = vmatpush.msra.mxu0 %v257
    %309 = vmatpush.msra.mxu0 %v256
    %310 = vmatpush.msra.mxu0 %v255
    %311 = vmatpush.msra.mxu0 %v254
    %312 = vmatpush.msra.mxu0 %v253
    %313 = vmatpush.msra.mxu0 %v252
    %314 = vmatpush.msra.mxu0 %v251
    %315 = vmatpush.msra.mxu0 %v250
    %316 = vmatpush.msra.mxu0 %v249
    %317 = vmatpush.msra.mxu0 %v248
    %318 = vmatpush.msra.mxu0 %v247
    %319 = vmatpush.msra.mxu0 %v246
    %320 = vmatmul.f32.gmra.mxu0 %v245
    %v321 = vpop.f32.mrf.mxu0
    %v322 = vadd.f32 %v264, %v321
    %323 = vdwg.mxu0
    %v324 = vsub.f32 0.0, %v322
    %v325 = vmul.f32 %v324, 1.442695
    %v326 = vpow.pop %v325
    %v327 = vadd.f32 %v326, 1.0
    %v328 = vrcp.pop %v327
    %v329 = vmul.f32 %v327, %v328
    %v330 = vsub.f32 1.0, %v329
    %v331 = vmul.f32 %v328, %v330
    %v332 = vadd.f32 %v328, %v331
    %vm333 = vweird.f32 %v327
    %vm334 = vweird.f32 %v328
    %vm335 = vmor %vm333, %vm334
    %v336 = vsel %vm335, %v328, %v332
    %v337 = vand.u32 2147483647, %v327
    %vm338 = vcmp.eq.f32.partialorder %v337, 8.507059e+37
    %v339 = vand.u32 %v327, 2147483648
    %v340 = vor.u32 1.1754944e-38, %v339
    %v341 = vsel %vm338, %v340, %v336
    %v342 = vld [vmem:[#allocation10] sm:$0xff]
    %v343 = vld [vmem:[#allocation10 + $0x8] sm:$0xff]
    %v344 = vld [vmem:[#allocation10 + $0x10] sm:$0xff]
    %v345 = vld [vmem:[#allocation10 + $0x18] sm:$0xff]
    %v346 = vld [vmem:[#allocation10 + $0x20] sm:$0xff]
    %v347 = vld [vmem:[#allocation10 + $0x28] sm:$0xff]
    %v348 = vld [vmem:[#allocation10 + $0x30] sm:$0xff]
    %v349 = vld [vmem:[#allocation10 + $0x38] sm:$0xff]
    %v350 = vld [vmem:[#allocation10 + $0x40] sm:$0xff]
    %v351 = vld [vmem:[#allocation10 + $0x48] sm:$0xff]
    %v352 = vld [vmem:[#allocation10 + $0x50] sm:$0xff]
    %v353 = vld [vmem:[#allocation10 + $0x58] sm:$0xff]
    %v354 = vld [vmem:[#allocation10 + $0x60] sm:$0xff]
    %v355 = vld [vmem:[#allocation10 + $0x68] sm:$0xff]
    %v356 = vld [vmem:[#allocation10 + $0x70] sm:$0xff]
    %v357 = vld [vmem:[#allocation10 + $0x78] sm:$0xff]
    %v358 = vld [vmem:[#allocation11] sm:$0xff]
    %v359 = vld [vmem:[#allocation11 + $0x8] sm:$0xff]
    %v360 = vld [vmem:[#allocation11 + $0x10] sm:$0xff]
    %v361 = vld [vmem:[#allocation11 + $0x18] sm:$0xff]
    %v362 = vld [vmem:[#allocation11 + $0x20] sm:$0xff]
    %v363 = vld [vmem:[#allocation11 + $0x28] sm:$0xff]
    %v364 = vld [vmem:[#allocation11 + $0x30] sm:$0xff]
    %v365 = vld [vmem:[#allocation11 + $0x38] sm:$0xff]
    %v366 = vld [vmem:[#allocation11 + $0x40] sm:$0xff]
    %v367 = vld [vmem:[#allocation11 + $0x48] sm:$0xff]
    %v368 = vld [vmem:[#allocation11 + $0x50] sm:$0xff]
    %v369 = vld [vmem:[#allocation11 + $0x58] sm:$0xff]
    %v370 = vld [vmem:[#allocation11 + $0x60] sm:$0xff]
    %v371 = vld [vmem:[#allocation11 + $0x68] sm:$0xff]
    %v372 = vld [vmem:[#allocation11 + $0x70] sm:$0xff]
    %v373 = vld [vmem:[#allocation11 + $0x78] sm:$0xff]
    %v374 = vld [vmem:[%s8] sm:$0x1]
    %375 = vmatpush.msra.mxu0 %v373
    %376 = vmatpush.msra.mxu0 %v372
    %377 = vmatpush.msra.mxu0 %v371
    %378 = vmatpush.msra.mxu0 %v370
    %379 = vmatpush.msra.mxu0 %v369
    %380 = vmatpush.msra.mxu0 %v368
    %381 = vmatpush.msra.mxu0 %v367
    %382 = vmatpush.msra.mxu0 %v366
    %383 = vmatpush.msra.mxu0 %v365
    %384 = vmatpush.msra.mxu0 %v364
    %385 = vmatpush.msra.mxu0 %v363
    %386 = vmatpush.msra.mxu0 %v362
    %387 = vmatpush.msra.mxu0 %v361
    %388 = vmatpush.msra.mxu0 %v360
    %389 = vmatpush.msra.mxu0 %v359
    %390 = vmatpush.msra.mxu0 %v358
    %391 = vmatmul.f32.gmra.mxu0 %v341
    %v392 = vpop.f32.mrf.mxu0
    %v393 = vadd.f32 0.0, %v392
    %394 = vdwg.mxu0
    %395 = vmatpush.msra.mxu0 %v357
    %396 = vmatpush.msra.mxu0 %v356
    %397 = vmatpush.msra.mxu0 %v355
    %398 = vmatpush.msra.mxu0 %v354
    %399 = vmatpush.msra.mxu0 %v353
    %400 = vmatpush.msra.mxu0 %v352
    %401 = vmatpush.msra.mxu0 %v351
    %402 = vmatpush.msra.mxu0 %v350
    %403 = vmatpush.msra.mxu0 %v349
    %404 = vmatpush.msra.mxu0 %v348
    %405 = vmatpush.msra.mxu0 %v347
    %406 = vmatpush.msra.mxu0 %v346
    %407 = vmatpush.msra.mxu0 %v345
    %408 = vmatpush.msra.mxu0 %v344
    %409 = vmatpush.msra.mxu0 %v343
    %410 = vmatpush.msra.mxu0 %v342
    %411 = vmatmul.f32.gmra.mxu0 %v303
    %v412 = vpop.f32.mrf.mxu0
    %v413 = vadd.f32 %v393, %v412
    %414 = vdwg.mxu0
    %v416 = vperm.slane %v374, 0
    %v418 = vadd.f32 %v413, %v416
    %v419 = vsub.f32 0.0, %v418
    %v420 = vmul.f32 %v419, 1.442695
    %v421 = vpow.pop %v420
    %v422 = vadd.f32 %v421, 1.0
    %v423 = vrcp.pop %v422
    %v424 = vmul.f32 %v422, %v423
    %v425 = vsub.f32 1.0, %v424
    %v426 = vmul.f32 %v423, %v425
    %v427 = vadd.f32 %v423, %v426
    %vm428 = vweird.f32 %v422
    %vm429 = vweird.f32 %v423
    %vm430 = vmor %vm428, %vm429
    %v431 = vsel %vm430, %v423, %v427
    %v432 = vand.u32 2147483647, %v422
    %vm433 = vcmp.eq.f32.partialorder %v432, 8.507059e+37
    %v434 = vand.u32 %v422, 2147483648
    %v435 = vor.u32 1.1754944e-38, %v434
    %v436 = vsel %vm433, %v435, %v431
    %v437 = vld [vmem:[#allocation13] sm:$0xff]
    %v438 = vld [vmem:[#allocation13 + $0x8] sm:$0xff]
    %v439 = vld [vmem:[#allocation13 + $0x10] sm:$0xff]
    %v440 = vld [vmem:[#allocation13 + $0x18] sm:$0xff]
    %v441 = vld [vmem:[#allocation13 + $0x20] sm:$0xff]
    %v442 = vld [vmem:[#allocation13 + $0x28] sm:$0xff]
    %v443 = vld [vmem:[#allocation13 + $0x30] sm:$0xff]
    %v444 = vld [vmem:[#allocation13 + $0x38] sm:$0xff]
    %v445 = vld [vmem:[#allocation13 + $0x40] sm:$0xff]
    %v446 = vld [vmem:[#allocation13 + $0x48] sm:$0xff]
    %v447 = vld [vmem:[#allocation13 + $0x50] sm:$0xff]
    %v448 = vld [vmem:[#allocation13 + $0x58] sm:$0xff]
    %v449 = vld [vmem:[#allocation13 + $0x60] sm:$0xff]
    %v450 = vld [vmem:[#allocation13 + $0x68] sm:$0xff]
    %v451 = vld [vmem:[#allocation13 + $0x70] sm:$0xff]
    %v452 = vld [vmem:[#allocation13 + $0x78] sm:$0xff]
    %v453 = vld [vmem:[%s10] sm:$0x1]
    %v455 = vperm.slane %v453, 0
    %457 = vmatpush.msra.mxu0 %v452
    %458 = vmatpush.msra.mxu0 %v451
    %459 = vmatpush.msra.mxu0 %v450
    %460 = vmatpush.msra.mxu0 %v449
    %461 = vmatpush.msra.mxu0 %v448
    %462 = vmatpush.msra.mxu0 %v447
    %463 = vmatpush.msra.mxu0 %v446
    %464 = vmatpush.msra.mxu0 %v445
    %465 = vmatpush.msra.mxu0 %v444
    %466 = vmatpush.msra.mxu0 %v443
    %467 = vmatpush.msra.mxu0 %v442
    %468 = vmatpush.msra.mxu0 %v441
    %469 = vmatpush.msra.mxu0 %v440
    %470 = vmatpush.msra.mxu0 %v439
    %471 = vmatpush.msra.mxu0 %v438
    %472 = vmatpush.msra.mxu0 %v437
    %473 = vmatmul.f32.gmra.mxu0 %v436
    %v474 = vpop.f32.mrf.mxu0
    %v475 = vadd.f32 %v455, %v474
    %476 = vdwg.mxu0
    %v477 = vsub.f32 0.0, %v475
    %v478 = vmul.f32 %v477, 1.442695
    %v479 = vpow.pop %v478
    %v480 = vadd.f32 %v479, 1.0
    %v481 = vrcp.pop %v480
    %v482 = vmul.f32 %v480, %v481
    %v483 = vsub.f32 1.0, %v482
    %v484 = vmul.f32 %v481, %v483
    %v485 = vadd.f32 %v481, %v484
    %vm486 = vweird.f32 %v480
    %vm487 = vweird.f32 %v481
    %vm488 = vmor %vm486, %vm487
    %v489 = vsel %vm488, %v481, %v485
    %v490 = vand.u32 2147483647, %v480
    %vm491 = vcmp.eq.f32.partialorder %v490, 8.507059e+37
    %v492 = vand.u32 %v480, 2147483648
    %v493 = vor.u32 1.1754944e-38, %v492
    %v494 = vsel %vm491, %v493, %v489
    %495 = vst [vmem:[#allocation14] sm:$0xff] %v494
    %496 = vst [vmem:[#allocation15] sm:$0xff] %v303
    %497 = vst [vmem:[#allocation17] sm:$0xff] %v341
    // Predicated region
    $region74: #{tpu_custom_call.1} parent=1 // pred_check
      _
    $region75: #{tpu_custom_call.1} parent=1 // pred_check_branch
      %499 = sbr.rel (0) target = $region77
    $region76: #{tpu_custom_call.1} parent=1 // pred_region
      %501 = vsyncadd [#allocation4], 0
      %s503 = sshll.u32 [#allocation14], 4
      %s504 = int_to_ptr.vmem [resolvable:$true] %s503
      %s505 = sshll.u32 %s11, 4
      %s506 = int_to_ptr.hbm [resolvable:$true] %s505
      %508 = dma.vmem_to_hbm [thread:$0]  %s504, 128, %s506, [#allocation4]
    $region77: #{tpu_custom_call.1} parent=1 // pred_fallthru
      _
    // Predicated region
    $region78: #{tpu_custom_call.1} parent=1 // pred_check
      _
    $region79: #{tpu_custom_call.1} parent=1 // pred_check_branch
      %510 = sbr.rel (0) target = $region81
    $region80: #{tpu_custom_call.1} parent=1 // pred_region
      %512 = vsyncadd [#allocation16], 0
      %s514 = sshll.u32 [#allocation15], 4
      %s515 = int_to_ptr.vmem [resolvable:$true] %s514
      %s516 = sshll.u32 %s12, 4
      %s517 = int_to_ptr.hbm [resolvable:$true] %s516
      %519 = dma.vmem_to_hbm [thread:$0]  %s515, 128, %s517, [#allocation16]
    $region81: #{tpu_custom_call.1} parent=1 // pred_fallthru
      _
    // Predicated region
    $region82: #{tpu_custom_call.1} parent=1 // pred_check
      _
    $region83: #{tpu_custom_call.1} parent=1 // pred_check_branch
      %521 = sbr.rel (0) target = $region85
    $region84: #{tpu_custom_call.1} parent=1 // pred_region
      %523 = vsyncadd [#allocation16], 0
      %s525 = sshll.u32 [#allocation17], 4
      %s526 = int_to_ptr.vmem [resolvable:$true] %s525
      %s527 = sshll.u32 %s13, 4
      %s528 = int_to_ptr.hbm [resolvable:$true] %s527
      %530 = dma.vmem_to_hbm [thread:$0]  %s526, 128, %s528, [#allocation16]
    $region85: #{tpu_custom_call.1} parent=1 // pred_fallthru
      _
    // Predicated region
    $region86: #{tpu_custom_call.1} parent=1 // pred_check
      _
    $region87: #{tpu_custom_call.1} parent=1 // pred_check_branch
      %532 = sbr.rel (0) target = $region89
    $region88: #{tpu_custom_call.1} parent=1 // pred_region
      %534 = dma.done [#allocation4], 128
    $region89: #{tpu_custom_call.1} parent=1 // pred_fallthru
      _
    // Predicated region
    $region90: #{tpu_custom_call.1} parent=1 // pred_check
      _
    $region91: #{tpu_custom_call.1} parent=1 // pred_check_branch
      %536 = sbr.rel (0) target = $region93
    $region92: #{tpu_custom_call.1} parent=1 // pred_region
      %538 = dma.done [#allocation16], 128
    $region93: #{tpu_custom_call.1} parent=1 // pred_fallthru
      _
    // Predicated region
    $region94: #{tpu_custom_call.1} parent=1 // pred_check
      _
    $region95: #{tpu_custom_call.1} parent=1 // pred_check_branch
      %540 = sbr.rel (0) target = $region97
    $region96: #{tpu_custom_call.1} parent=1 // pred_region
      %542 = dma.done [#allocation16], 128
    $region97: #{tpu_custom_call.1} parent=1 // pred_fallthru
      _
    %543 = vsyncpa [#allocation3], 1
    %544 = vsyncpa [#allocation6], 1
    %545 = vsyncpa [#allocation9], 1
    %546 = vsyncpa [#allocation12], 1
    %547 = vsyncpa [#allocation4], 1
    %548 = vsyncpa [#allocation16], 1

</llo_original>
